<compile_context>
chip_gen: v7x
topology: tpu7x:2x2x1
jax: 0.10.0
libtpu: 0.0.40
codegen_flags: <defaults>
</compile_context>

<pallas_src>
import functools
import math

import jax
import jax.numpy as jnp
from jax.experimental import pallas as pl
from jax.experimental.pallas import tpu as pltpu


# ----------------------------------------------------------------------------
# Kernel
# ----------------------------------------------------------------------------
def _crf_kernel(e1l_ref, e1r_ref, e2l_ref, e2r_ref, cnl_ref, cnr_ref, out_ref,
                *, shift, m1, m2):
    # e1l_ref: [1, Ta, K1p]   augmented (coord+guidance) lhs, pre-scaled, +ln(w1) bias
    # e1r_ref: [1, K1p, Tb]   augmented (coord+guidance) rhs
    # e2l_ref: [Ta, K2p]      augmented coord-only lhs, pre-scaled by -1/(2*gamma), +ln(w2)
    # e2r_ref: [K2p, Tb]      augmented coord-only rhs
    # cnl_ref: [1, Ta, Ccp]   NEGATED clusters, sample-major
    # cnr_ref: [1, Ccp, Tb]   clusters, channel-major
    # out_ref: [1, Ta, Tb]
    e1 = jnp.dot(e1l_ref[0], e1r_ref[0], preferred_element_type=jnp.float32)
    e2 = jnp.dot(e2l_ref[...], e2r_ref[...], preferred_element_type=jnp.float32)
    cneg = jnp.dot(cnl_ref[0], cnr_ref[0], preferred_element_type=jnp.float32)

    t1 = jnp.exp(e1)                      # == w1 * exp(orig exponent 1)  (ln w1 folded)
    t2 = jnp.exp(e2)                      # == w2 * exp(orig exponent 2)  (ln w2 folded)
    if m1 != 1.0:                         # fallback when w1 <= 0 (ln not foldable)
        t1 = m1 * t1
    if m2 != 1.0:
        t2 = m2 * t2
    sim = t1 + t2
    if shift != 0.0:
        sim = sim - shift
    out_ref[0] = (cneg * sim).astype(out_ref.dtype)


# ----------------------------------------------------------------------------
# Helpers
# ----------------------------------------------------------------------------
def _pick_tile(s_pad, cap):
    t = min(s_pad, max(128, cap))
    t = (t // 128) * 128
    while s_pad % t:
        t -= 128
    return t


def _pad_axis(x, axis, target):
    cur = x.shape[axis]
    if cur == target:
        return x
    pads = [(0, 0)] * x.ndim
    pads[axis] = (0, target - cur)
    return jnp.pad(x, pads)


def _round_up(n, m):
    return ((n + m - 1) // m) * m


def _tpu_generation_defaults():
    """Return (tile_cap, vmem_limit_bytes, is_v7x) from the local device kind."""
    try:
        kind = jax.devices()[0].device_kind.lower()
    except Exception:  # pragma: no cover - defensive
        kind = ""
    if "v7" in kind:
        # 64 MiB physical VMEM: 512 tile already ~85% efficient; don't overshoot.
        return 512, None, True
    if "v6" in kind or "v5e" in kind or "v5 lite" in kind or "v5lite" in kind:
        # 128 MiB physical VMEM: bigger tiles amortize grid-step overhead.
        return 1024, 64 << 20, False
    return 512, None, False


# ----------------------------------------------------------------------------
# Wrapper
# ----------------------------------------------------------------------------
def contrastive_crf_loss(guidance, clusters, coords, *,
                         alpha, beta, gamma, w1, w2, shift,
                         tile_cap=None, out_dtype=jnp.float32):
    """guidance: [B, Cg, H, W], clusters: [B, Cc, H, W], coords: [2, S] int32.

    Returns -(cluster_sims * sim_kernel) with shape [B, S, S], matching
    ContrastiveCRFLoss.forward given the same sampled coords.
    """
    B, Cg, H, W = guidance.shape
    _, Cc, _, _ = clusters.shape
    S = coords.shape[1]

    auto_cap, vmem_limit, is_v7x = _tpu_generation_defaults()
    if tile_cap is None:
        tile_cap = auto_cap

    sa = -1.0 / (2.0 * float(alpha))
    sb = -1.0 / (2.0 * float(beta))
    sg = -1.0 / (2.0 * float(gamma))
    # Fold ln(w) into the exponent bias whenever w > 0 (the common case).
    if float(w1) > 0.0:
        b1, m1 = math.log(float(w1)), 1.0
    else:
        b1, m1 = 0.0, float(w1)
    if float(w2) > 0.0:
        b2, m2 = math.log(float(w2)), 1.0
    else:
        b2, m2 = 0.0, float(w2)

    # ---- glue (O(S*C), not the hot path): gather sampled pixels, center ----
    cf = coords.astype(jnp.float32)                                    # [2, S]
    cf = cf - jnp.mean(cf, axis=1, keepdims=True)                      # translation-invariant
    sel_g = guidance[:, :, coords[0], coords[1]].astype(jnp.float32)   # [B, Cg, S]
    sel_g = sel_g - jnp.mean(sel_g, axis=2, keepdims=True)
    sel_c = clusters[:, :, coords[0], coords[1]].astype(jnp.float32)   # [B, Cc, S]

    # ---- pad S to a lane-dense multiple of 128 (zero rows -> cropped) ----
    s_pad = _round_up(S, 128)
    cf = _pad_axis(cf, 1, s_pad)
    sel_g = _pad_axis(sel_g, 2, s_pad)
    sel_c = _pad_axis(sel_c, 2, s_pad)
    # Pad cluster channel dim to a sublane multiple of 8 (zeros are harmless).
    Ccp = _round_up(Cc, 8)
    sel_c = _pad_axis(sel_c, 1, Ccp)

    c_sq = jnp.sum(cf * cf, axis=0)                                    # [Sp]
    g_sq = jnp.sum(sel_g * sel_g, axis=1)                              # [B, Sp]

    # ---- exponent-1 operands (coord + guidance fused, pre-scaled) ----
    # e1 = sa*coord_diff + sb*guidance_diff + ln(w1), via a single matmul.
    K1 = Cg + 4
    K1p = _round_up(K1, 8)
    bias1 = sa * c_sq[None, :] + sb * g_sq                             # [B, Sp]
    lhs1_parts = [
        jnp.broadcast_to(((-2.0 * sa) * cf).T[None], (B, s_pad, 2)),   # coord
        jnp.transpose((-2.0 * sb) * sel_g, (0, 2, 1)),                 # guidance
        (bias1 + b1)[:, :, None],                                      # * rhs ones
        jnp.ones((B, s_pad, 1), jnp.float32),                          # * rhs bias
    ]
    rhs1_parts = [
        jnp.broadcast_to(cf[None], (B, 2, s_pad)),
        sel_g,
        jnp.ones((B, 1, s_pad), jnp.float32),
        bias1[:, None, :],
    ]
    if K1p > K1:
        lhs1_parts.append(jnp.zeros((B, s_pad, K1p - K1), jnp.float32))
        rhs1_parts.append(jnp.zeros((B, K1p - K1, s_pad), jnp.float32))
    e1_lhs = jnp.concatenate(lhs1_parts, axis=2)                       # [B, Sp, K1p]
    e1_rhs = jnp.concatenate(rhs1_parts, axis=1)                       # [B, K1p, Sp]

    # ---- exponent-2 operands (coord-only, batch independent, pre-scaled) ----
    # e2 = sg*coord_diff + ln(w2).
    K2p = 8
    e2_lhs = jnp.concatenate([
        ((-2.0 * sg) * cf).T,                                          # [Sp, 2]
        (sg * c_sq + b2)[:, None],                                     # [Sp, 1]
        jnp.ones((s_pad, 1), jnp.float32),                             # [Sp, 1]
        jnp.zeros((s_pad, K2p - 4), jnp.float32),
    ], axis=1)                                                          # [Sp, 8]
    e2_rhs = jnp.concatenate([
        cf,                                                            # [2, Sp]
        jnp.ones((1, s_pad), jnp.float32),
        (sg * c_sq)[None, :],
        jnp.zeros((K2p - 4, s_pad), jnp.float32),
    ], axis=0)                                                          # [8, Sp]

    # ---- cluster Gram operands (minus sign folded into lhs) ----
    cn_lhs = -jnp.transpose(sel_c, (0, 2, 1))                          # [B, Sp, Ccp]
    cn_rhs = sel_c                                                     # [B, Ccp, Sp]

    # ---- tiling ----
    ta = _pick_tile(s_pad, tile_cap)
    tb = _pick_tile(s_pad, tile_cap)
    # v7x has 2 TensorCores sharded over the parallel grid axes: make sure the
    # grid has at least 2 steps when possible.
    if is_v7x and B * (s_pad // ta) * (s_pad // tb) < 2 and s_pad >= 256:
        ta = _pick_tile(s_pad, s_pad // 2)

    kernel = functools.partial(_crf_kernel, shift=float(shift), m1=m1, m2=m2)

    cp_kwargs = dict(dimension_semantics=("parallel", "parallel", "parallel"))
    if vmem_limit is not None:
        cp_kwargs["vmem_limit_bytes"] = vmem_limit

    out = pl.pallas_call(
        kernel,
        out_shape=jax.ShapeDtypeStruct((B, s_pad, s_pad), out_dtype),
        grid=(B, s_pad // ta, s_pad // tb),
        in_specs=[
            pl.BlockSpec((1, ta, K1p), lambda b, ia, ib: (b, ia, 0)),   # e1 lhs
            pl.BlockSpec((1, K1p, tb), lambda b, ia, ib: (b, 0, ib)),   # e1 rhs
            pl.BlockSpec((ta, K2p), lambda b, ia, ib: (ia, 0)),         # e2 lhs
            pl.BlockSpec((K2p, tb), lambda b, ia, ib: (0, ib)),         # e2 rhs
            pl.BlockSpec((1, ta, Ccp), lambda b, ia, ib: (b, ia, 0)),   # -clusters lhs
            pl.BlockSpec((1, Ccp, tb), lambda b, ia, ib: (b, 0, ib)),   # clusters rhs
        ],
        out_specs=pl.BlockSpec((1, ta, tb), lambda b, ia, ib: (b, ia, ib)),
        compiler_params=pltpu.CompilerParams(**cp_kwargs),
    )(e1_lhs, e1_rhs, e2_lhs, e2_rhs, cn_lhs, cn_rhs)

    if s_pad != S:
        out = out[:, :S, :S]
    return out


# ----------------------------------------------------------------------------
# Pure-JAX reference (mirror of the PyTorch forward) for verification
# ----------------------------------------------------------------------------
def _reference_loss(guidance, clusters, coords, *,
                    alpha, beta, gamma, w1, w2, shift):
    sel_g = guidance[:, :, coords[0], coords[1]]                       # [B, Cg, S]
    sel_c = clusters[:, :, coords[0], coords[1]]                       # [B, Cc, S]
    cf = coords.astype(jnp.float32)
    coord_diff = jnp.sum((cf[:, :, None] - cf[:, None, :]) ** 2, 0)[None]      # [1,S,S]
    guidance_diff = jnp.sum((sel_g[:, :, :, None] - sel_g[:, :, None, :]) ** 2, 1)
    sim_kernel = (w1 * jnp.exp(-coord_diff / (2 * alpha) - guidance_diff / (2 * beta))
                  + w2 * jnp.exp(-coord_diff / (2 * gamma)) - shift)
    cluster_sims = jnp.einsum('nka,nkb->nab', sel_c, sel_c)
    return -(cluster_sims * sim_kernel)


if __name__ == "__main__":
    # Module hyperparameters (deterministic, typical STEGO-style config).
    n_samples = 128
    alpha, beta, gamma = 0.5, 0.15, 0.25
    w1, w2, shift = 10.0, 3.0, 0.0

    B, Cg, Cc, H, W = 2, 4, 32, 16, 16

    key = jax.random.PRNGKey(0)
    kg, kc, kr, kcol = jax.random.split(key, 4)
    guidance = jax.random.normal(kg, (B, Cg, H, W), dtype=jnp.float32)
    clusters = jax.random.normal(kc, (B, Cc, H, W), dtype=jnp.float32)

    # Random pixel coordinates (equivalent of torch.randint sampling); the
    # coordinate sampling itself stays host/JAX-side so the kernel is
    # deterministic given the same coords.
    rows = jax.random.randint(kr, (1, n_samples), 0, H, dtype=jnp.int32)
    cols = jax.random.randint(kcol, (1, n_samples), 0, W, dtype=jnp.int32)
    coords = jnp.concatenate([rows, cols], axis=0)                     # [2, S]

    out = contrastive_crf_loss(
        guidance, clusters, coords,
        alpha=alpha, beta=beta, gamma=gamma, w1=w1, w2=w2, shift=shift)
    out = jax.block_until_ready(out)

    ref = _reference_loss(
        guidance, clusters, coords,
        alpha=alpha, beta=beta, gamma=gamma, w1=w1, w2=w2, shift=shift)

    assert out.shape == (B, n_samples, n_samples)
    # Gram-identity distances (with centered coords) lose a few ulps vs the
    # exact broadcast form; tolerance reflects that (f32 everywhere).
    assert jnp.allclose(out, ref, rtol=1e-3, atol=1e-2), "mismatch vs reference"
    print("KERNEL_OK")
</pallas_src>

<mosaic_0001>
module attributes {stable_mosaic.version = 11 : i64} {
  func.func @_crf_kernel(%arg0: i32, %arg1: i32, %arg2: i32, %arg3: memref<1x128x8xf32, #tpu.memory_space<vmem>>, %arg4: memref<1x8x128xf32, #tpu.memory_space<vmem>>, %arg5: memref<128x8xf32, #tpu.memory_space<vmem>>, %arg6: memref<8x128xf32, #tpu.memory_space<vmem>>, %arg7: memref<1x128x32xf32, #tpu.memory_space<vmem>>, %arg8: memref<1x32x128xf32, #tpu.memory_space<vmem>>, %arg9: memref<1x128x128xf32, #tpu.memory_space<vmem>>) attributes {dimension_semantics = [#tpu.dimension_semantics<parallel>, #tpu.dimension_semantics<parallel>, #tpu.dimension_semantics<parallel>], iteration_bounds = array<i64: 2, 1, 1>, scalar_prefetch = 0 : i64, scratch_operands = 0 : i64, tpu.core_type = #tpu.core_type<tc>, window_params = [{transform_indices = @transform_0, window_bounds = array<i64: 1, 128, 8>}, {transform_indices = @transform_1, window_bounds = array<i64: 1, 8, 128>}, {transform_indices = @transform_2, window_bounds = array<i64: 128, 8>}, {transform_indices = @transform_3, window_bounds = array<i64: 8, 128>}, {transform_indices = @transform_4, window_bounds = array<i64: 1, 128, 32>}, {transform_indices = @transform_5, window_bounds = array<i64: 1, 32, 128>}, {transform_indices = @transform_6, window_bounds = array<i64: 1, 128, 128>}]} {
    %c0 = arith.constant 0 : index
    %c0_0 = arith.constant 0 : index
    %c0_1 = arith.constant 0 : index
    %0 = vector.load %arg3[%c0, %c0_0, %c0_1] : memref<1x128x8xf32, #tpu.memory_space<vmem>>, vector<1x128x8xf32>
    %1 = vector.shape_cast %0 : vector<1x128x8xf32> to vector<128x8xf32>
    %c0_2 = arith.constant 0 : index
    %c0_3 = arith.constant 0 : index
    %c0_4 = arith.constant 0 : index
    %2 = vector.load %arg4[%c0_2, %c0_3, %c0_4] : memref<1x8x128xf32, #tpu.memory_space<vmem>>, vector<1x8x128xf32>
    %3 = vector.shape_cast %2 : vector<1x8x128xf32> to vector<8x128xf32>
    %cst = arith.constant dense<0.000000e+00> : vector<128x128xf32>
    %4 = tpu.matmul %1, %3, %cst {dimension_numbers = #tpu.dot_dimension_numbers<[1], [0], [0], [1], [0, 0, 1, 1], [], []>} : vector<128x8xf32>, vector<8x128xf32>, vector<128x128xf32> -> vector<128x128xf32>
    %c0_5 = arith.constant 0 : index
    %c0_6 = arith.constant 0 : index
    %5 = vector.load %arg5[%c0_5, %c0_6] : memref<128x8xf32, #tpu.memory_space<vmem>>, vector<128x8xf32>
    %c0_7 = arith.constant 0 : index
    %c0_8 = arith.constant 0 : index
    %6 = vector.load %arg6[%c0_7, %c0_8] : memref<8x128xf32, #tpu.memory_space<vmem>>, vector<8x128xf32>
    %cst_9 = arith.constant dense<0.000000e+00> : vector<128x128xf32>
    %7 = tpu.matmul %5, %6, %cst_9 {dimension_numbers = #tpu.dot_dimension_numbers<[1], [0], [0], [1], [0, 0, 1, 1], [], []>} : vector<128x8xf32>, vector<8x128xf32>, vector<128x128xf32> -> vector<128x128xf32>
    %c0_10 = arith.constant 0 : index
    %c0_11 = arith.constant 0 : index
    %c0_12 = arith.constant 0 : index
    %8 = vector.load %arg7[%c0_10, %c0_11, %c0_12] : memref<1x128x32xf32, #tpu.memory_space<vmem>>, vector<1x128x32xf32>
    %9 = vector.shape_cast %8 : vector<1x128x32xf32> to vector<128x32xf32>
    %c0_13 = arith.constant 0 : index
    %c0_14 = arith.constant 0 : index
    %c0_15 = arith.constant 0 : index
    %10 = vector.load %arg8[%c0_13, %c0_14, %c0_15] : memref<1x32x128xf32, #tpu.memory_space<vmem>>, vector<1x32x128xf32>
    %11 = vector.shape_cast %10 : vector<1x32x128xf32> to vector<32x128xf32>
    %cst_16 = arith.constant dense<0.000000e+00> : vector<128x128xf32>
    %12 = tpu.matmul %9, %11, %cst_16 {dimension_numbers = #tpu.dot_dimension_numbers<[1], [0], [0], [1], [0, 0, 1, 1], [], []>} : vector<128x32xf32>, vector<32x128xf32>, vector<128x128xf32> -> vector<128x128xf32>
    %13 = math.exp %4 : vector<128x128xf32>
    %14 = math.exp %7 : vector<128x128xf32>
    %15 = arith.addf %13, %14 : vector<128x128xf32>
    %16 = arith.mulf %12, %15 : vector<128x128xf32>
    %c0_17 = arith.constant 0 : index
    %c0_18 = arith.constant 0 : index
    %c0_19 = arith.constant 0 : index
    %17 = vector.load %arg9[%c0_17, %c0_18, %c0_19] : memref<1x128x128xf32, #tpu.memory_space<vmem>>, vector<1x128x128xf32>
    %18 = vector.shape_cast %17 : vector<1x128x128xf32> to vector<128x128xf32>
    %19 = vector.shape_cast %16 : vector<128x128xf32> to vector<1x128x128xf32>
    tpu.vector_store %arg9[%c0_17, %c0_18, %c0_19], %19 {strides = array<i32>} : memref<1x128x128xf32, #tpu.memory_space<vmem>>, vector<1x128x128xf32>,
    return
  }
  func.func @transform_0(%arg0: i32, %arg1: i32, %arg2: i32) -> (i32, i32, i32) {
    %c0_i32 = arith.constant 0 : i32
    %c0_i32_0 = arith.constant 0 : i32
    return %arg0, %arg1, %c0_i32 : i32, i32, i32
  }
  func.func @transform_1(%arg0: i32, %arg1: i32, %arg2: i32) -> (i32, i32, i32) {
    %c0_i32 = arith.constant 0 : i32
    %c0_i32_0 = arith.constant 0 : i32
    return %arg0, %c0_i32, %arg2 : i32, i32, i32
  }
  func.func @transform_2(%arg0: i32, %arg1: i32, %arg2: i32) -> (i32, i32) {
    %c0_i32 = arith.constant 0 : i32
    %c0_i32_0 = arith.constant 0 : i32
    return %arg1, %c0_i32 : i32, i32
  }
  func.func @transform_3(%arg0: i32, %arg1: i32, %arg2: i32) -> (i32, i32) {
    %c0_i32 = arith.constant 0 : i32
    %c0_i32_0 = arith.constant 0 : i32
    return %c0_i32, %arg2 : i32, i32
  }
  func.func @transform_4(%arg0: i32, %arg1: i32, %arg2: i32) -> (i32, i32, i32) {
    %c0_i32 = arith.constant 0 : i32
    %c0_i32_0 = arith.constant 0 : i32
    return %arg0, %arg1, %c0_i32 : i32, i32, i32
  }
  func.func @transform_5(%arg0: i32, %arg1: i32, %arg2: i32) -> (i32, i32, i32) {
    %c0_i32 = arith.constant 0 : i32
    %c0_i32_0 = arith.constant 0 : i32
    return %arg0, %c0_i32, %arg2 : i32, i32, i32
  }
  func.func @transform_6(%arg0: i32, %arg1: i32, %arg2: i32) -> (i32, i32, i32) {
    %c0_i32 = arith.constant 0 : i32
    return %arg0, %arg1, %arg2 : i32, i32, i32
  }
}

</mosaic_0001>

<llo_original>
// kernel: tpu_custom_call.1
$region0: #{tpu_custom_call.1}
  #allocation0 [shape = 'u32[]', space=smem, size = 0x4, offset = 0x4, fixed_abs, tag = 'smem constant byte address 0x4 - core index']
  #allocation1 [shape = 'u32[144,128]{1,0:T(1,128)}', space=vmem, size = 0x12000, scoped, tag = 'internal scratch']
  %s0 = inlined_call_operand.vmem [shape: f32[2,128,8], index: 0, kind: input, shape index: {}]
  %s1 = inlined_call_operand.vmem [shape: f32[2,8,128], index: 1, kind: input, shape index: {}]
  %s2 = inlined_call_operand.vmem [shape: f32[128,8], index: 2, kind: input, shape index: {}]
  %s3 = inlined_call_operand.vmem [shape: f32[8,128], index: 3, kind: input, shape index: {}]
  %s4 = inlined_call_operand.vmem [shape: f32[2,128,32], index: 4, kind: input, shape index: {}]
  %s5 = inlined_call_operand.vmem [shape: f32[2,32,128], index: 5, kind: input, shape index: {}]
  %s6 = inlined_call_operand.hbm [shape: f32[2,128,128], index: 6, kind: output, shape index: {}]
  %s7 = sld [smem:[#allocation0]]
  $region57: #{tpu_custom_call.1} parent=0
    _
  %s9 = ssub.s32 1, %s7
  %s10 = scalar_select 0, %s9, %s7
  $region1: #{tpu_custom_call.1} parent=0
    #allocation2 [shape = 'u8[131072]{0}', space=vmem, size = 0x20000, scoped, tag = 'output window, operand 0']
    #allocation3 [shape = 's32[2]{0}', space=sflag, size = 0x8, scoped, tag = 'scoped memory for tpu_custom_call.1']
    %11 = vsyncpa [#allocation3], 0
    %s12 = scalar_lea.sflag [#allocation3], 1
    %13 = vsyncpa %s12, 0
    loop: start=0, step=1, limit=4
    $region2: #{tpu_custom_call.1} parent=1 // loop_pre_header
      _
    $region3: #{tpu_custom_call.1} parent=1 // loop_header
      %s15 = sphi 0, %s19
      %p16 = scmp.ge.s32.totalorder %s15, 4
      %s22 = sphi 0, %s41
      %s23 = sphi 0, %s37
      %s24 = sphi 0, %s33
      %s25 = sphi 0, %s22
      %s26 = sphi 0, %s23
      %s27 = sphi 0, %s24
      %s28 = sphi 0, %s25
      %s29 = sphi 0, %s26
      %s30 = sphi 0, %s27
      %s46 = sphi 0, %s48
      %s49 = sphi 0, %s46
      %s50 = sphi 0, %s49
      %s66 = sphi 0, %s50
      %s74 = sphi 0, %s76
      %s77 = sphi 0, %s74
      %s78 = sphi 0, %s77
      %s94 = sphi 0, %s78
      %s100 = sphi 0, %s102
      %s103 = sphi 0, %s100
      %s104 = sphi 0, %s103
      %s120 = sphi 0, %s104
      %s126 = sphi 0, %s128
      %s129 = sphi 0, %s126
      %s130 = sphi 0, %s129
      %s146 = sphi 0, %s130
      %s154 = sphi 0, %s156
      %s157 = sphi 0, %s154
      %s158 = sphi 0, %s157
      %s174 = sphi 0, %s158
      %s182 = sphi 0, %s184
      %s185 = sphi 0, %s182
      %s186 = sphi 0, %s185
      %s202 = sphi 0, %s186
      %s212 = sphi 0, %s214
      %s215 = sphi 0, %s212
      %s216 = sphi 0, %s215
      %s232 = sphi 0, %s216
    $region4: #{tpu_custom_call.1} parent=1 // loop_header_branch
      %18 = sbr.rel (%p16) target = $region8
    $region5: #{tpu_custom_call.1} parent=1 // loop_body
      %s20 = ssub.s32 %s15, 1
      %s21 = ssub.s32 %s15, 2
      %s31 = sadd.s32 1, %s24
      %p32 = scmp.ge.s32.totalorder %s31, 1
      %s33 = scalar_select %p32, 0, %s31
      %s34 = sadd.s32 1, %s23
      %s35 = scalar_select %p32, %s34, %s23
      %p36 = scmp.ge.s32.totalorder %s35, 1
      %s37 = scalar_select %p36, 0, %s35
      %s38 = sadd.s32 1, %s22
      %s39 = scalar_select %p36, %s38, %s22
      %p40 = scmp.ge.s32.totalorder %s39, 2
      %s41 = scalar_select %p40, 0, %s39
      %s42 = ssub.s32 %s22, %s41
      %s43 = ssub.s32 %s23, %s37
      %s44 = sor.u32 %s42, %s43
      %p45 = scmp.eq.s32.totalorder %s44, 0
      %s47 = sadd.s32 %s46, 1
      %s48 = scalar_select %p45, %s46, %s47
      %p51 = pneg %p45
      %p52 = scmp.eq.s32.totalorder %s15, 1
      %p53 = por %p51, %p52
      %p54 = scmp.ne.s32.totalorder %s46, %s49
      %p55 = scmp.eq.s32.totalorder %s15, 0
      %p56 = por %p54, %p55
      %p57 = scmp.ne.s32.totalorder %s46, %s49
      %p58 = scmp.eq.s32.totalorder %s20, 1
      %p59 = por %p57, %p58
      %p60 = scmp.ne.s32.totalorder %s49, %s50
      %p61 = scmp.eq.s32.totalorder %s20, 0
      %p62 = por %p60, %p61
      %p63 = scmp.ne.s32.totalorder %s49, %s50
      %p64 = scmp.eq.s32.totalorder %s21, 1
      %p65 = por %p63, %p64
      %p67 = scmp.ne.s32.totalorder %s50, %s66
      %p68 = scmp.eq.s32.totalorder %s21, 0
      %p69 = por %p67, %p68
      %s70 = ssub.s32 %s22, %s41
      %s71 = ssub.s32 %s24, %s33
      %s72 = sor.u32 %s70, %s71
      %p73 = scmp.eq.s32.totalorder %s72, 0
      %s75 = sadd.s32 %s74, 1
      %s76 = scalar_select %p73, %s74, %s75
      %p79 = pneg %p73
      %p80 = scmp.eq.s32.totalorder %s15, 1
      %p81 = por %p79, %p80
      %p82 = scmp.ne.s32.totalorder %s74, %s77
      %p83 = scmp.eq.s32.totalorder %s15, 0
      %p84 = por %p82, %p83
      %p85 = scmp.ne.s32.totalorder %s74, %s77
      %p86 = scmp.eq.s32.totalorder %s20, 1
      %p87 = por %p85, %p86
      %p88 = scmp.ne.s32.totalorder %s77, %s78
      %p89 = scmp.eq.s32.totalorder %s20, 0
      %p90 = por %p88, %p89
      %p91 = scmp.ne.s32.totalorder %s77, %s78
      %p92 = scmp.eq.s32.totalorder %s21, 1
      %p93 = por %p91, %p92
      %p95 = scmp.ne.s32.totalorder %s78, %s94
      %p96 = scmp.eq.s32.totalorder %s21, 0
      %p97 = por %p95, %p96
      %s98 = ssub.s32 %s23, %s37
      %p99 = scmp.eq.s32.totalorder %s98, 0
      %s101 = sadd.s32 %s100, 1
      %s102 = scalar_select %p99, %s100, %s101
      %p105 = pneg %p99
      %p106 = scmp.eq.s32.totalorder %s15, 1
      %p107 = por %p105, %p106
      %p108 = scmp.ne.s32.totalorder %s100, %s103
      %p109 = scmp.eq.s32.totalorder %s15, 0
      %p110 = por %p108, %p109
      %p111 = scmp.ne.s32.totalorder %s100, %s103
      %p112 = scmp.eq.s32.totalorder %s20, 1
      %p113 = por %p111, %p112
      %p114 = scmp.ne.s32.totalorder %s103, %s104
      %p115 = scmp.eq.s32.totalorder %s20, 0
      %p116 = por %p114, %p115
      %p117 = scmp.ne.s32.totalorder %s103, %s104
      %p118 = scmp.eq.s32.totalorder %s21, 1
      %p119 = por %p117, %p118
      %p121 = scmp.ne.s32.totalorder %s104, %s120
      %p122 = scmp.eq.s32.totalorder %s21, 0
      %p123 = por %p121, %p122
      %s124 = ssub.s32 %s24, %s33
      %p125 = scmp.eq.s32.totalorder %s124, 0
      %s127 = sadd.s32 %s126, 1
      %s128 = scalar_select %p125, %s126, %s127
      %p131 = pneg %p125
      %p132 = scmp.eq.s32.totalorder %s15, 1
      %p133 = por %p131, %p132
      %p134 = scmp.ne.s32.totalorder %s126, %s129
      %p135 = scmp.eq.s32.totalorder %s15, 0
      %p136 = por %p134, %p135
      %p137 = scmp.ne.s32.totalorder %s126, %s129
      %p138 = scmp.eq.s32.totalorder %s20, 1
      %p139 = por %p137, %p138
      %p140 = scmp.ne.s32.totalorder %s129, %s130
      %p141 = scmp.eq.s32.totalorder %s20, 0
      %p142 = por %p140, %p141
      %p143 = scmp.ne.s32.totalorder %s129, %s130
      %p144 = scmp.eq.s32.totalorder %s21, 1
      %p145 = por %p143, %p144
      %p147 = scmp.ne.s32.totalorder %s130, %s146
      %p148 = scmp.eq.s32.totalorder %s21, 0
      %p149 = por %p147, %p148
      %s150 = ssub.s32 %s22, %s41
      %s151 = ssub.s32 %s23, %s37
      %s152 = sor.u32 %s150, %s151
      %p153 = scmp.eq.s32.totalorder %s152, 0
      %s155 = sadd.s32 %s154, 1
      %s156 = scalar_select %p153, %s154, %s155
      %p159 = pneg %p153
      %p160 = scmp.eq.s32.totalorder %s15, 1
      %p161 = por %p159, %p160
      %p162 = scmp.ne.s32.totalorder %s154, %s157
      %p163 = scmp.eq.s32.totalorder %s15, 0
      %p164 = por %p162, %p163
      %p165 = scmp.ne.s32.totalorder %s154, %s157
      %p166 = scmp.eq.s32.totalorder %s20, 1
      %p167 = por %p165, %p166
      %p168 = scmp.ne.s32.totalorder %s157, %s158
      %p169 = scmp.eq.s32.totalorder %s20, 0
      %p170 = por %p168, %p169
      %p171 = scmp.ne.s32.totalorder %s157, %s158
      %p172 = scmp.eq.s32.totalorder %s21, 1
      %p173 = por %p171, %p172
      %p175 = scmp.ne.s32.totalorder %s158, %s174
      %p176 = scmp.eq.s32.totalorder %s21, 0
      %p177 = por %p175, %p176
      %s178 = ssub.s32 %s22, %s41
      %s179 = ssub.s32 %s24, %s33
      %s180 = sor.u32 %s178, %s179
      %p181 = scmp.eq.s32.totalorder %s180, 0
      %s183 = sadd.s32 %s182, 1
      %s184 = scalar_select %p181, %s182, %s183
      %p187 = pneg %p181
      %p188 = scmp.eq.s32.totalorder %s15, 1
      %p189 = por %p187, %p188
      %p190 = scmp.ne.s32.totalorder %s182, %s185
      %p191 = scmp.eq.s32.totalorder %s15, 0
      %p192 = por %p190, %p191
      %p193 = scmp.ne.s32.totalorder %s182, %s185
      %p194 = scmp.eq.s32.totalorder %s20, 1
      %p195 = por %p193, %p194
      %p196 = scmp.ne.s32.totalorder %s185, %s186
      %p197 = scmp.eq.s32.totalorder %s20, 0
      %p198 = por %p196, %p197
      %p199 = scmp.ne.s32.totalorder %s185, %s186
      %p200 = scmp.eq.s32.totalorder %s21, 1
      %p201 = por %p199, %p200
      %p203 = scmp.ne.s32.totalorder %s186, %s202
      %p204 = scmp.eq.s32.totalorder %s21, 0
      %p205 = por %p203, %p204
      %s206 = ssub.s32 %s22, %s41
      %s207 = ssub.s32 %s23, %s37
      %s208 = sor.u32 %s206, %s207
      %s209 = ssub.s32 %s24, %s33
      %s210 = sor.u32 %s208, %s209
      %p211 = scmp.eq.s32.totalorder %s210, 0
      %s213 = sadd.s32 %s212, 1
      %s214 = scalar_select %p211, %s212, %s213
      %p217 = pneg %p211
      %p218 = scmp.eq.s32.totalorder %s15, 1
      %p219 = por %p217, %p218
      %p220 = scmp.ne.s32.totalorder %s212, %s215
      %p221 = scmp.eq.s32.totalorder %s15, 0
      %p222 = por %p220, %p221
      %p223 = scmp.ne.s32.totalorder %s212, %s215
      %p224 = scmp.eq.s32.totalorder %s20, 1
      %p225 = por %p223, %p224
      %p226 = scmp.ne.s32.totalorder %s215, %s216
      %p227 = scmp.eq.s32.totalorder %s20, 0
      %p228 = por %p226, %p227
      %p229 = scmp.ne.s32.totalorder %s215, %s216
      %p230 = scmp.eq.s32.totalorder %s21, 1
      %p231 = por %p229, %p230
      %p233 = scmp.ne.s32.totalorder %s216, %s232
      %p234 = scmp.eq.s32.totalorder %s21, 0
      %p235 = por %p233, %p234
      %p236 = scmp.le.s32.totalorder 1, %s15
      %p237 = scmp.lt.s32.totalorder %s15, 3
      %p238 = pnand %p236, %p237
      %p239 = pneg %p238
      // Predicated region
      $region9: #{tpu_custom_call.1} parent=5 // pred_check
        _
      $region10: #{tpu_custom_call.1} parent=5 // pred_check_branch
        %241 = sbr.rel (%p238) target = $region12
      $region11: #{tpu_custom_call.1} parent=5 // pred_region
        %s242 = ssub.s32 %s15, 1
        // Predicated region
        $region13: #{tpu_custom_call.1} parent=11 // pred_check
          %p243 = pneg %p116
        $region14: #{tpu_custom_call.1} parent=11 // pred_check_branch
          %245 = sbr.rel (%p243) target = $region16
        $region15: #{tpu_custom_call.1} parent=11 // pred_region
          %s246 = smul.u32 16, %s26
          %p247 = scmp.lt.s32.totalorder %s246, 15
          %s248 = scalar_select %p247, %s246, 15
          %s249 = smul.addr %s248, 8
          %s250 = scalar_lea.vmem %s2, %s249
          %s251 = smul.u32 16, %s26
        $region16: #{tpu_custom_call.1} parent=11 // pred_fallthru
          _
        // Predicated region
        $region17: #{tpu_custom_call.1} parent=11 // pred_check
          %p252 = pneg %p142
        $region18: #{tpu_custom_call.1} parent=11 // pred_check_branch
          %254 = sbr.rel (%p252) target = $region20
        $region19: #{tpu_custom_call.1} parent=11 // pred_region
          %p255 = scmp.lt.s32.totalorder %s27, 0
          %s256 = scalar_select %p255, %s27, 0
          %s257 = smul.addr %s256, 8
          %s258 = scalar_lea.vmem %s3, %s257
        $region20: #{tpu_custom_call.1} parent=11 // pred_fallthru
          _
      $region12: #{tpu_custom_call.1} parent=5 // pred_fallthru
        _
      %p259 = scmp.lt.s32.totalorder %s15, 2
      // Predicated region
      $region21: #{tpu_custom_call.1} parent=5 // pred_check
        %p260 = pneg %p259
      $region22: #{tpu_custom_call.1} parent=5 // pred_check_branch
        %262 = sbr.rel (%p260) target = $region24
      $region23: #{tpu_custom_call.1} parent=5 // pred_region
        // Predicated region
        $region25: #{tpu_custom_call.1} parent=23 // pred_check
          %p263 = pneg %p56
        $region26: #{tpu_custom_call.1} parent=23 // pred_check_branch
          %265 = sbr.rel (%p263) target = $region28
        $region27: #{tpu_custom_call.1} parent=23 // pred_region
          %s266 = smul.u32 16, %s23
          %p267 = scmp.lt.s32.totalorder %s22, 1
          %s268 = scalar_select %p267, %s22, 1
          %p269 = scmp.lt.s32.totalorder %s266, 15
          %s270 = scalar_select %p269, %s266, 15
          %s271 = smul.addr %s268, 16
          %s272 = sadd.s32 %s270, %s271
          %s273 = smul.addr %s272, 8
          %s274 = scalar_lea.vmem %s0, %s273
          %s275 = smul.u32 16, %s23
        $region28: #{tpu_custom_call.1} parent=23 // pred_fallthru
          _
        // Predicated region
        $region29: #{tpu_custom_call.1} parent=23 // pred_check
          %p276 = pneg %p84
        $region30: #{tpu_custom_call.1} parent=23 // pred_check_branch
          %278 = sbr.rel (%p276) target = $region32
        $region31: #{tpu_custom_call.1} parent=23 // pred_region
          %p279 = scmp.lt.s32.totalorder %s22, 1
          %s280 = scalar_select %p279, %s22, 1
          %p281 = scmp.lt.s32.totalorder %s24, 0
          %s282 = scalar_select %p281, %s24, 0
          %s283 = sadd.s32 %s282, %s280
          %s284 = smul.addr %s283, 8
          %s285 = scalar_lea.vmem %s1, %s284
        $region32: #{tpu_custom_call.1} parent=23 // pred_fallthru
          _
        // Predicated region
        $region33: #{tpu_custom_call.1} parent=23 // pred_check
          %p286 = pneg %p164
        $region34: #{tpu_custom_call.1} parent=23 // pred_check_branch
          %288 = sbr.rel (%p286) target = $region36
        $region35: #{tpu_custom_call.1} parent=23 // pred_region
          %s289 = smul.u32 16, %s23
          %p290 = scmp.lt.s32.totalorder %s22, 1
          %s291 = scalar_select %p290, %s22, 1
          %p292 = scmp.lt.s32.totalorder %s289, 15
          %s293 = scalar_select %p292, %s289, 15
          %s294 = smul.addr %s291, 16
          %s295 = sadd.s32 %s293, %s294
          %s296 = smul.addr %s295, 8
          %s297 = scalar_lea.vmem %s4, %s296
          %s298 = smul.u32 16, %s23
        $region36: #{tpu_custom_call.1} parent=23 // pred_fallthru
          _
        // Predicated region
        $region37: #{tpu_custom_call.1} parent=23 // pred_check
          %p299 = pneg %p192
        $region38: #{tpu_custom_call.1} parent=23 // pred_check_branch
          %301 = sbr.rel (%p299) target = $region40
        $region39: #{tpu_custom_call.1} parent=23 // pred_region
          %p302 = scmp.lt.s32.totalorder %s22, 1
          %s303 = scalar_select %p302, %s22, 1
          %p304 = scmp.lt.s32.totalorder %s24, 0
          %s305 = scalar_select %p304, %s24, 0
          %s306 = smul.addr %s303, 4
          %s307 = sadd.s32 %s305, %s306
          %s308 = smul.addr %s307, 8
          %s309 = scalar_lea.vmem %s5, %s308
        $region40: #{tpu_custom_call.1} parent=23 // pred_fallthru
          _
      $region24: #{tpu_custom_call.1} parent=5 // pred_fallthru
        _
      %p310 = scmp.le.s32.totalorder 1, %s15
      %p311 = scmp.lt.s32.totalorder %s15, 3
      %p312 = pnand %p310, %p311
      %p313 = pneg %p312
      // Predicated region
      $region41: #{tpu_custom_call.1} parent=5 // pred_check
        _
      $region42: #{tpu_custom_call.1} parent=5 // pred_check_branch
        %315 = sbr.rel (%p312) target = $region44
      $region43: #{tpu_custom_call.1} parent=5 // pred_region
        %s316 = ssub.s32 %s15, 1
        %s317 = smul.u32 16, %s26
        %p318 = scmp.lt.s32.totalorder %s25, 1
        %s319 = scalar_select %p318, %s25, 1
        %p320 = scmp.lt.s32.totalorder %s317, 15
        %s321 = scalar_select %p320, %s317, 15
        %s322 = smul.addr %s319, 16
        %s323 = sadd.s32 %s321, %s322
        %s324 = smul.addr %s323, 8
        %s325 = scalar_lea.vmem %s0, %s324
        %p326 = pneg %p62
        %p327 = pneg %p59
        %p328 = scmp.lt.s32.totalorder %s25, 1
        %s329 = scalar_select %p328, %s25, 1
        %p330 = scmp.lt.s32.totalorder %s27, 0
        %s331 = scalar_select %p330, %s27, 0
        %s332 = sadd.s32 %s331, %s329
        %s333 = smul.addr %s332, 8
        %s334 = scalar_lea.vmem %s1, %s333
        %p335 = pneg %p90
        %p336 = pneg %p87
        %s337 = smul.u32 16, %s26
        %p338 = scmp.lt.s32.totalorder %s337, 15
        %s339 = scalar_select %p338, %s337, 15
        %s340 = smul.addr %s339, 8
        %s341 = scalar_lea.vmem %s2, %s340
        %p342 = pneg %p116
        %p343 = pneg %p113
        %p344 = scmp.lt.s32.totalorder %s27, 0
        %s345 = scalar_select %p344, %s27, 0
        %s346 = smul.addr %s345, 8
        %s347 = scalar_lea.vmem %s3, %s346
        %p348 = pneg %p142
        %p349 = pneg %p139
        %s350 = smul.u32 16, %s26
        %p351 = scmp.lt.s32.totalorder %s25, 1
        %s352 = scalar_select %p351, %s25, 1
        %p353 = scmp.lt.s32.totalorder %s350, 15
        %s354 = scalar_select %p353, %s350, 15
        %s355 = smul.addr %s352, 16
        %s356 = sadd.s32 %s354, %s355
        %s357 = smul.addr %s356, 8
        %s358 = scalar_lea.vmem %s4, %s357
        %p359 = pneg %p170
        %p360 = pneg %p167
        %p361 = scmp.lt.s32.totalorder %s25, 1
        %s362 = scalar_select %p361, %s25, 1
        %p363 = scmp.lt.s32.totalorder %s27, 0
        %s364 = scalar_select %p363, %s27, 0
        %s365 = smul.addr %s362, 4
        %s366 = sadd.s32 %s364, %s365
        %s367 = smul.addr %s366, 8
        %s368 = scalar_lea.vmem %s5, %s367
        %p369 = pneg %p198
        %p370 = pneg %p195
        %p371 = pneg %p228
        %p372 = pneg %p225
        %s373 = sand.u32 %s215, 1
        %s374 = scalar_lea.sflag [#allocation3], %s373
        %s375 = sand.u32 %s215, 1
        %s376 = smul.addr %s375, 128
        %s377 = scalar_lea.vmem [#allocation2], %s376
        %s378 = smul.u32 16, %s26
        %p379 = scmp.lt.s32.totalorder %s25, 1
        %s380 = scalar_select %p379, %s25, 1
        %p381 = scmp.lt.s32.totalorder %s378, 15
        %s382 = scalar_select %p381, %s378, 15
        %s383 = smul.addr %s380, 16
        %s384 = sadd.s32 %s382, %s383
        %s385 = smul.addr %s384, 8
        %s386 = scalar_lea.vmem %s0, %s385
        %s387 = smul.u32 16, %s26
        %p388 = scmp.lt.s32.totalorder %s25, 1
        %s389 = scalar_select %p388, %s25, 1
        %p390 = scmp.lt.s32.totalorder %s27, 0
        %s391 = scalar_select %p390, %s27, 0
        %s392 = sadd.s32 %s391, %s389
        %s393 = smul.addr %s392, 8
        %s394 = scalar_lea.vmem %s1, %s393
        %s395 = smul.u32 16, %s26
        %p396 = scmp.lt.s32.totalorder %s395, 15
        %s397 = scalar_select %p396, %s395, 15
        %s398 = smul.addr %s397, 8
        %s399 = scalar_lea.vmem %s2, %s398
        %s400 = smul.u32 16, %s26
        %p401 = scmp.lt.s32.totalorder %s27, 0
        %s402 = scalar_select %p401, %s27, 0
        %s403 = smul.addr %s402, 8
        %s404 = scalar_lea.vmem %s3, %s403
        %s405 = smul.u32 16, %s26
        %p406 = scmp.lt.s32.totalorder %s25, 1
        %s407 = scalar_select %p406, %s25, 1
        %p408 = scmp.lt.s32.totalorder %s405, 15
        %s409 = scalar_select %p408, %s405, 15
        %s410 = smul.addr %s407, 16
        %s411 = sadd.s32 %s409, %s410
        %s412 = smul.addr %s411, 8
        %s413 = scalar_lea.vmem %s4, %s412
        %s414 = smul.u32 16, %s26
        %p415 = scmp.lt.s32.totalorder %s25, 1
        %s416 = scalar_select %p415, %s25, 1
        %p417 = scmp.lt.s32.totalorder %s27, 0
        %s418 = scalar_select %p417, %s27, 0
        %s419 = smul.addr %s416, 4
        %s420 = sadd.s32 %s418, %s419
        %s421 = smul.addr %s420, 8
        %s422 = scalar_lea.vmem %s5, %s421
        %s423 = smul.u32 16, %s26
        %v424 = vld [vmem:[%s386] sm:$0xff]
        %v425 = vld [vmem:[%s386 + $0x8] sm:$0xff]
        %v426 = vld [vmem:[%s386 + $0x10] sm:$0xff]
        %v427 = vld [vmem:[%s386 + $0x18] sm:$0xff]
        %v428 = vld [vmem:[%s386 + $0x20] sm:$0xff]
        %v429 = vld [vmem:[%s386 + $0x28] sm:$0xff]
        %v430 = vld [vmem:[%s386 + $0x30] sm:$0xff]
        %v431 = vld [vmem:[%s386 + $0x38] sm:$0xff]
        %v432 = vld [vmem:[%s386 + $0x40] sm:$0xff]
        %v433 = vld [vmem:[%s386 + $0x48] sm:$0xff]
        %v434 = vld [vmem:[%s386 + $0x50] sm:$0xff]
        %v435 = vld [vmem:[%s386 + $0x58] sm:$0xff]
        %v436 = vld [vmem:[%s386 + $0x60] sm:$0xff]
        %v437 = vld [vmem:[%s386 + $0x68] sm:$0xff]
        %v438 = vld [vmem:[%s386 + $0x70] sm:$0xff]
        %v439 = vld [vmem:[%s386 + $0x78] sm:$0xff]
        %v440 = vld [vmem:[%s394] sm:$0xff]
        %vm441 = vcmask 64512
        %v443 = vsel %vm441, %v424, 0
        %v446 = vsel %vm441, %v425, 0
        %v449 = vsel %vm441, %v426, 0
        %v452 = vsel %vm441, %v427, 0
        %v455 = vsel %vm441, %v428, 0
        %v458 = vsel %vm441, %v429, 0
        %v461 = vsel %vm441, %v430, 0
        %v464 = vsel %vm441, %v431, 0
        %v467 = vsel %vm441, %v432, 0
        %v470 = vsel %vm441, %v433, 0
        %v473 = vsel %vm441, %v434, 0
        %v476 = vsel %vm441, %v435, 0
        %v479 = vsel %vm441, %v436, 0
        %v482 = vsel %vm441, %v437, 0
        %v485 = vsel %vm441, %v438, 0
        %v488 = vsel %vm441, %v439, 0
        %490 = vmatprep.subr.mxu0 0.0
        %491 = vmatpush1.msra.mxu0 %v440
        %492 = vmatprep.subr.mxu0 0.0
        %493 = vmatpush1.msra.mxu0 0.0
        %494 = vmatprep.subr.mxu0 0.0
        %495 = vmatpush1.msra.mxu0 0.0
        %496 = vmatprep.subr.mxu0 0.0
        %497 = vmatpush1.msra.mxu0 0.0
        %498 = vmatprep.subr.mxu0 0.0
        %499 = vmatpush1.msra.mxu0 0.0
        %500 = vmatprep.subr.mxu0 0.0
        %501 = vmatpush1.msra.mxu0 0.0
        %502 = vmatprep.subr.mxu0 0.0
        %503 = vmatpush1.msra.mxu0 0.0
        %504 = vmatprep.subr.mxu0 0.0
        %505 = vmatpush1.msra.mxu0 0.0
        %506 = vmatprep.subr.mxu0 0.0
        %507 = vmatpush1.msra.mxu0 0.0
        %508 = vmatprep.subr.mxu0 0.0
        %509 = vmatpush1.msra.mxu0 0.0
        %510 = vmatprep.subr.mxu0 0.0
        %511 = vmatpush1.msra.mxu0 0.0
        %512 = vmatprep.subr.mxu0 0.0
        %513 = vmatpush1.msra.mxu0 0.0
        %514 = vmatprep.subr.mxu0 0.0
        %515 = vmatpush1.msra.mxu0 0.0
        %516 = vmatprep.subr.mxu0 0.0
        %517 = vmatpush1.msra.mxu0 0.0
        %518 = vmatprep.subr.mxu0 0.0
        %519 = vmatpush1.msra.mxu0 0.0
        %520 = vmatprep.subr.mxu0 0.0
        %521 = vmatpush1.msra.mxu0 0.0
        %522 = vmatprep.subr.mxu0 0.0
        %523 = vmatpush1.msra.mxu0 0.0
        %524 = vmatprep.subr.mxu0 0.0
        %525 = vmatpush1.msra.mxu0 0.0
        %526 = vmatprep.subr.mxu0 0.0
        %527 = vmatpush1.msra.mxu0 0.0
        %528 = vmatprep.subr.mxu0 0.0
        %529 = vmatpush1.msra.mxu0 0.0
        %530 = vmatprep.subr.mxu0 0.0
        %531 = vmatpush1.msra.mxu0 0.0
        %532 = vmatprep.subr.mxu0 0.0
        %533 = vmatpush1.msra.mxu0 0.0
        %534 = vmatprep.subr.mxu0 0.0
        %535 = vmatpush1.msra.mxu0 0.0
        %536 = vmatprep.subr.mxu0 0.0
        %537 = vmatpush1.msra.mxu0 0.0
        %538 = vmatprep.subr.mxu0 0.0
        %539 = vmatpush1.msra.mxu0 0.0
        %540 = vmatprep.subr.mxu0 0.0
        %541 = vmatpush1.msra.mxu0 0.0
        %542 = vmatprep.subr.mxu0 0.0
        %543 = vmatpush1.msra.mxu0 0.0
        %544 = vmatprep.subr.mxu0 0.0
        %545 = vmatpush1.msra.mxu0 0.0
        %546 = vmatprep.subr.mxu0 0.0
        %547 = vmatpush1.msra.mxu0 0.0
        %548 = vmatprep.subr.mxu0 0.0
        %549 = vmatpush1.msra.mxu0 0.0
        %550 = vmatprep.subr.mxu0 0.0
        %551 = vmatpush1.msra.mxu0 0.0
        %552 = vmatprep.subr.mxu0 0.0
        %553 = vmatpush1.msra.mxu0 0.0
        %554 = vmatprep.mubr.f32.mxu0 0.0
        %555 = vmatmul.mubr.f32.gmra.mrb[0].mxu0 %v443
        %v556 = vpop.f32.mrb[0].mxu0
        %v557 = vadd.f32 0.0, %v556
        %v558 = vpop.f32.mrb[0].mxu0
        %559 = vmatprep.mubr.f32.mxu0 0.0
        %560 = vmatmul.mubr.f32.gmra.mrb[0].mxu0 %v446
        %v561 = vpop.f32.mrb[0].mxu0
        %v562 = vadd.f32 0.0, %v561
        %v563 = vpop.f32.mrb[0].mxu0
        %564 = vmatprep.mubr.f32.mxu0 0.0
        %565 = vmatmul.mubr.f32.gmra.mrb[0].mxu0 %v449
        %v566 = vpop.f32.mrb[0].mxu0
        %v567 = vadd.f32 0.0, %v566
        %v568 = vpop.f32.mrb[0].mxu0
        %569 = vmatprep.mubr.f32.mxu0 0.0
        %570 = vmatmul.mubr.f32.gmra.mrb[0].mxu0 %v452
        %v571 = vpop.f32.mrb[0].mxu0
        %v572 = vadd.f32 0.0, %v571
        %v573 = vpop.f32.mrb[0].mxu0
        %574 = vmatprep.mubr.f32.mxu0 0.0
        %575 = vmatmul.mubr.f32.gmra.mrb[0].mxu0 %v455
        %v576 = vpop.f32.mrb[0].mxu0
        %v577 = vadd.f32 0.0, %v576
        %v578 = vpop.f32.mrb[0].mxu0
        %579 = vmatprep.mubr.f32.mxu0 0.0
        %580 = vmatmul.mubr.f32.gmra.mrb[0].mxu0 %v458
        %v581 = vpop.f32.mrb[0].mxu0
        %v582 = vadd.f32 0.0, %v581
        %v583 = vpop.f32.mrb[0].mxu0
        %584 = vmatprep.mubr.f32.mxu0 0.0
        %585 = vmatmul.mubr.f32.gmra.mrb[0].mxu0 %v461
        %v586 = vpop.f32.mrb[0].mxu0
        %v587 = vadd.f32 0.0, %v586
        %v588 = vpop.f32.mrb[0].mxu0
        %589 = vmatprep.mubr.f32.mxu0 0.0
        %590 = vmatmul.mubr.f32.gmra.mrb[0].mxu0 %v464
        %v591 = vpop.f32.mrb[0].mxu0
        %v592 = vadd.f32 0.0, %v591
        %v593 = vpop.f32.mrb[0].mxu0
        %594 = vmatprep.mubr.f32.mxu0 0.0
        %595 = vmatmul.mubr.f32.gmra.mrb[0].mxu0 %v467
        %v596 = vpop.f32.mrb[0].mxu0
        %v597 = vadd.f32 0.0, %v596
        %v598 = vpop.f32.mrb[0].mxu0
        %599 = vmatprep.mubr.f32.mxu0 0.0
        %600 = vmatmul.mubr.f32.gmra.mrb[0].mxu0 %v470
        %v601 = vpop.f32.mrb[0].mxu0
        %v602 = vadd.f32 0.0, %v601
        %v603 = vpop.f32.mrb[0].mxu0
        %604 = vmatprep.mubr.f32.mxu0 0.0
        %605 = vmatmul.mubr.f32.gmra.mrb[0].mxu0 %v473
        %v606 = vpop.f32.mrb[0].mxu0
        %v607 = vadd.f32 0.0, %v606
        %v608 = vpop.f32.mrb[0].mxu0
        %609 = vmatprep.mubr.f32.mxu0 0.0
        %610 = vmatmul.mubr.f32.gmra.mrb[0].mxu0 %v476
        %v611 = vpop.f32.mrb[0].mxu0
        %v612 = vadd.f32 0.0, %v611
        %v613 = vpop.f32.mrb[0].mxu0
        %614 = vmatprep.mubr.f32.mxu0 0.0
        %615 = vmatmul.mubr.f32.gmra.mrb[0].mxu0 %v479
        %v616 = vpop.f32.mrb[0].mxu0
        %v617 = vadd.f32 0.0, %v616
        %v618 = vpop.f32.mrb[0].mxu0
        %619 = vmatprep.mubr.f32.mxu0 0.0
        %620 = vmatmul.mubr.f32.gmra.mrb[0].mxu0 %v482
        %v621 = vpop.f32.mrb[0].mxu0
        %v622 = vadd.f32 0.0, %v621
        %v623 = vpop.f32.mrb[0].mxu0
        %624 = vmatprep.mubr.f32.mxu0 0.0
        %625 = vmatmul.mubr.f32.gmra.mrb[0].mxu0 %v485
        %v626 = vpop.f32.mrb[0].mxu0
        %v627 = vadd.f32 0.0, %v626
        %v628 = vpop.f32.mrb[0].mxu0
        %629 = vmatprep.mubr.f32.mxu0 0.0
        %630 = vmatmul.mubr.f32.gmra.mrb[0].mxu0 %v488
        %v631 = vpop.f32.mrb[0].mxu0
        %v632 = vadd.f32 0.0, %v631
        %v633 = vpop.f32.mrb[0].mxu0
        %634 = vdwg.mxu0
        %v635 = vld [vmem:[%s399] sm:$0xff]
        %v636 = vld [vmem:[%s399 + $0x8] sm:$0xff]
        %v637 = vld [vmem:[%s399 + $0x10] sm:$0xff]
        %v638 = vld [vmem:[%s399 + $0x18] sm:$0xff]
        %v639 = vld [vmem:[%s399 + $0x20] sm:$0xff]
        %v640 = vld [vmem:[%s399 + $0x28] sm:$0xff]
        %v641 = vld [vmem:[%s399 + $0x30] sm:$0xff]
        %v642 = vld [vmem:[%s399 + $0x38] sm:$0xff]
        %v643 = vld [vmem:[%s399 + $0x40] sm:$0xff]
        %v644 = vld [vmem:[%s399 + $0x48] sm:$0xff]
        %v645 = vld [vmem:[%s399 + $0x50] sm:$0xff]
        %v646 = vld [vmem:[%s399 + $0x58] sm:$0xff]
        %v647 = vld [vmem:[%s399 + $0x60] sm:$0xff]
        %v648 = vld [vmem:[%s399 + $0x68] sm:$0xff]
        %v649 = vld [vmem:[%s399 + $0x70] sm:$0xff]
        %v650 = vld [vmem:[%s399 + $0x78] sm:$0xff]
        %v651 = vld [vmem:[%s404] sm:$0xff]
        %v653 = vsel %vm441, %v635, 0
        %v656 = vsel %vm441, %v636, 0
        %v659 = vsel %vm441, %v637, 0
        %v662 = vsel %vm441, %v638, 0
        %v665 = vsel %vm441, %v639, 0
        %v668 = vsel %vm441, %v640, 0
        %v671 = vsel %vm441, %v641, 0
        %v674 = vsel %vm441, %v642, 0
        %v677 = vsel %vm441, %v643, 0
        %v680 = vsel %vm441, %v644, 0
        %v683 = vsel %vm441, %v645, 0
        %v686 = vsel %vm441, %v646, 0
        %v689 = vsel %vm441, %v647, 0
        %v692 = vsel %vm441, %v648, 0
        %v695 = vsel %vm441, %v649, 0
        %v698 = vsel %vm441, %v650, 0
        %700 = vmatprep.subr.mxu0 0.0
        %701 = vmatpush1.msra.mxu0 %v651
        %702 = vmatprep.subr.mxu0 0.0
        %703 = vmatpush1.msra.mxu0 0.0
        %704 = vmatprep.subr.mxu0 0.0
        %705 = vmatpush1.msra.mxu0 0.0
        %706 = vmatprep.subr.mxu0 0.0
        %707 = vmatpush1.msra.mxu0 0.0
        %708 = vmatprep.subr.mxu0 0.0
        %709 = vmatpush1.msra.mxu0 0.0
        %710 = vmatprep.subr.mxu0 0.0
        %711 = vmatpush1.msra.mxu0 0.0
        %712 = vmatprep.subr.mxu0 0.0
        %713 = vmatpush1.msra.mxu0 0.0
        %714 = vmatprep.subr.mxu0 0.0
        %715 = vmatpush1.msra.mxu0 0.0
        %716 = vmatprep.subr.mxu0 0.0
        %717 = vmatpush1.msra.mxu0 0.0
        %718 = vmatprep.subr.mxu0 0.0
        %719 = vmatpush1.msra.mxu0 0.0
        %720 = vmatprep.subr.mxu0 0.0
        %721 = vmatpush1.msra.mxu0 0.0
        %722 = vmatprep.subr.mxu0 0.0
        %723 = vmatpush1.msra.mxu0 0.0
        %724 = vmatprep.subr.mxu0 0.0
        %725 = vmatpush1.msra.mxu0 0.0
        %726 = vmatprep.subr.mxu0 0.0
        %727 = vmatpush1.msra.mxu0 0.0
        %728 = vmatprep.subr.mxu0 0.0
        %729 = vmatpush1.msra.mxu0 0.0
        %730 = vmatprep.subr.mxu0 0.0
        %731 = vmatpush1.msra.mxu0 0.0
        %732 = vmatprep.subr.mxu0 0.0
        %733 = vmatpush1.msra.mxu0 0.0
        %734 = vmatprep.subr.mxu0 0.0
        %735 = vmatpush1.msra.mxu0 0.0
        %736 = vmatprep.subr.mxu0 0.0
        %737 = vmatpush1.msra.mxu0 0.0
        %738 = vmatprep.subr.mxu0 0.0
        %739 = vmatpush1.msra.mxu0 0.0
        %740 = vmatprep.subr.mxu0 0.0
        %741 = vmatpush1.msra.mxu0 0.0
        %742 = vmatprep.subr.mxu0 0.0
        %743 = vmatpush1.msra.mxu0 0.0
        %744 = vmatprep.subr.mxu0 0.0
        %745 = vmatpush1.msra.mxu0 0.0
        %746 = vmatprep.subr.mxu0 0.0
        %747 = vmatpush1.msra.mxu0 0.0
        %748 = vmatprep.subr.mxu0 0.0
        %749 = vmatpush1.msra.mxu0 0.0
        %750 = vmatprep.subr.mxu0 0.0
        %751 = vmatpush1.msra.mxu0 0.0
        %752 = vmatprep.subr.mxu0 0.0
        %753 = vmatpush1.msra.mxu0 0.0
        %754 = vmatprep.subr.mxu0 0.0
        %755 = vmatpush1.msra.mxu0 0.0
        %756 = vmatprep.subr.mxu0 0.0
        %757 = vmatpush1.msra.mxu0 0.0
        %758 = vmatprep.subr.mxu0 0.0
        %759 = vmatpush1.msra.mxu0 0.0
        %760 = vmatprep.subr.mxu0 0.0
        %761 = vmatpush1.msra.mxu0 0.0
        %762 = vmatprep.subr.mxu0 0.0
        %763 = vmatpush1.msra.mxu0 0.0
        %764 = vmatprep.mubr.f32.mxu0 0.0
        %765 = vmatmul.mubr.f32.gmra.mrb[0].mxu0 %v653
        %v766 = vpop.f32.mrb[0].mxu0
        %v767 = vadd.f32 0.0, %v766
        %v768 = vpop.f32.mrb[0].mxu0
        %769 = vmatprep.mubr.f32.mxu0 0.0
        %770 = vmatmul.mubr.f32.gmra.mrb[0].mxu0 %v656
        %v771 = vpop.f32.mrb[0].mxu0
        %v772 = vadd.f32 0.0, %v771
        %v773 = vpop.f32.mrb[0].mxu0
        %774 = vmatprep.mubr.f32.mxu0 0.0
        %775 = vmatmul.mubr.f32.gmra.mrb[0].mxu0 %v659
        %v776 = vpop.f32.mrb[0].mxu0
        %v777 = vadd.f32 0.0, %v776
        %v778 = vpop.f32.mrb[0].mxu0
        %779 = vmatprep.mubr.f32.mxu0 0.0
        %780 = vmatmul.mubr.f32.gmra.mrb[0].mxu0 %v662
        %v781 = vpop.f32.mrb[0].mxu0
        %v782 = vadd.f32 0.0, %v781
        %v783 = vpop.f32.mrb[0].mxu0
        %784 = vmatprep.mubr.f32.mxu0 0.0
        %785 = vmatmul.mubr.f32.gmra.mrb[0].mxu0 %v665
        %v786 = vpop.f32.mrb[0].mxu0
        %v787 = vadd.f32 0.0, %v786
        %v788 = vpop.f32.mrb[0].mxu0
        %789 = vmatprep.mubr.f32.mxu0 0.0
        %790 = vmatmul.mubr.f32.gmra.mrb[0].mxu0 %v668
        %v791 = vpop.f32.mrb[0].mxu0
        %v792 = vadd.f32 0.0, %v791
        %v793 = vpop.f32.mrb[0].mxu0
        %794 = vmatprep.mubr.f32.mxu0 0.0
        %795 = vmatmul.mubr.f32.gmra.mrb[0].mxu0 %v671
        %v796 = vpop.f32.mrb[0].mxu0
        %v797 = vadd.f32 0.0, %v796
        %v798 = vpop.f32.mrb[0].mxu0
        %799 = vmatprep.mubr.f32.mxu0 0.0
        %800 = vmatmul.mubr.f32.gmra.mrb[0].mxu0 %v674
        %v801 = vpop.f32.mrb[0].mxu0
        %v802 = vadd.f32 0.0, %v801
        %v803 = vpop.f32.mrb[0].mxu0
        %804 = vmatprep.mubr.f32.mxu0 0.0
        %805 = vmatmul.mubr.f32.gmra.mrb[0].mxu0 %v677
        %v806 = vpop.f32.mrb[0].mxu0
        %v807 = vadd.f32 0.0, %v806
        %v808 = vpop.f32.mrb[0].mxu0
        %809 = vmatprep.mubr.f32.mxu0 0.0
        %810 = vmatmul.mubr.f32.gmra.mrb[0].mxu0 %v680
        %v811 = vpop.f32.mrb[0].mxu0
        %v812 = vadd.f32 0.0, %v811
        %v813 = vpop.f32.mrb[0].mxu0
        %814 = vmatprep.mubr.f32.mxu0 0.0
        %815 = vmatmul.mubr.f32.gmra.mrb[0].mxu0 %v683
        %v816 = vpop.f32.mrb[0].mxu0
        %v817 = vadd.f32 0.0, %v816
        %v818 = vpop.f32.mrb[0].mxu0
        %819 = vmatprep.mubr.f32.mxu0 0.0
        %820 = vmatmul.mubr.f32.gmra.mrb[0].mxu0 %v686
        %v821 = vpop.f32.mrb[0].mxu0
        %v822 = vadd.f32 0.0, %v821
        %v823 = vpop.f32.mrb[0].mxu0
        %824 = vmatprep.mubr.f32.mxu0 0.0
        %825 = vmatmul.mubr.f32.gmra.mrb[0].mxu0 %v689
        %v826 = vpop.f32.mrb[0].mxu0
        %v827 = vadd.f32 0.0, %v826
        %v828 = vpop.f32.mrb[0].mxu0
        %829 = vmatprep.mubr.f32.mxu0 0.0
        %830 = vmatmul.mubr.f32.gmra.mrb[0].mxu0 %v692
        %v831 = vpop.f32.mrb[0].mxu0
        %v832 = vadd.f32 0.0, %v831
        %v833 = vpop.f32.mrb[0].mxu0
        %834 = vmatprep.mubr.f32.mxu0 0.0
        %835 = vmatmul.mubr.f32.gmra.mrb[0].mxu0 %v695
        %v836 = vpop.f32.mrb[0].mxu0
        %v837 = vadd.f32 0.0, %v836
        %v838 = vpop.f32.mrb[0].mxu0
        %839 = vmatprep.mubr.f32.mxu0 0.0
        %840 = vmatmul.mubr.f32.gmra.mrb[0].mxu0 %v698
        %v841 = vpop.f32.mrb[0].mxu0
        %v842 = vadd.f32 0.0, %v841
        %v843 = vpop.f32.mrb[0].mxu0
        %844 = vdwg.mxu0
        %v845 = vld [vmem:[%s413] sm:$0xff]
        %v846 = vld [vmem:[%s413 + $0x8] sm:$0xff]
        %v847 = vld [vmem:[%s413 + $0x10] sm:$0xff]
        %v848 = vld [vmem:[%s413 + $0x18] sm:$0xff]
        %v849 = vld [vmem:[%s413 + $0x20] sm:$0xff]
        %v850 = vld [vmem:[%s413 + $0x28] sm:$0xff]
        %v851 = vld [vmem:[%s413 + $0x30] sm:$0xff]
        %v852 = vld [vmem:[%s413 + $0x38] sm:$0xff]
        %v853 = vld [vmem:[%s413 + $0x40] sm:$0xff]
        %v854 = vld [vmem:[%s413 + $0x48] sm:$0xff]
        %v855 = vld [vmem:[%s413 + $0x50] sm:$0xff]
        %v856 = vld [vmem:[%s413 + $0x58] sm:$0xff]
        %v857 = vld [vmem:[%s413 + $0x60] sm:$0xff]
        %v858 = vld [vmem:[%s413 + $0x68] sm:$0xff]
        %v859 = vld [vmem:[%s413 + $0x70] sm:$0xff]
        %v860 = vld [vmem:[%s413 + $0x78] sm:$0xff]
        %v861 = vld [vmem:[%s422] sm:$0xff]
        %v862 = vld [vmem:[%s422 + $0x8] sm:$0xff]
        %v863 = vld [vmem:[%s422 + $0x10] sm:$0xff]
        %v864 = vld [vmem:[%s422 + $0x18] sm:$0xff]
        %vm865 = vcmask 261120
        %v867 = vsel %vm865, %v845, 0
        %v870 = vsel %vm865, %v846, 0
        %v873 = vsel %vm865, %v847, 0
        %v876 = vsel %vm865, %v848, 0
        %v879 = vsel %vm865, %v849, 0
        %v882 = vsel %vm865, %v850, 0
        %v885 = vsel %vm865, %v851, 0
        %v888 = vsel %vm865, %v852, 0
        %v891 = vsel %vm865, %v853, 0
        %v894 = vsel %vm865, %v854, 0
        %v897 = vsel %vm865, %v855, 0
        %v900 = vsel %vm865, %v856, 0
        %v903 = vsel %vm865, %v857, 0
        %v906 = vsel %vm865, %v858, 0
        %v909 = vsel %vm865, %v859, 0
        %v912 = vsel %vm865, %v860, 0
        %914 = vmatprep.subr.mxu0 0.0
        %915 = vmatpush1.msra.mxu0 %v861
        %916 = vmatprep.subr.mxu0 0.0
        %917 = vmatpush1.msra.mxu0 %v862
        %918 = vmatprep.subr.mxu0 0.0
        %919 = vmatpush1.msra.mxu0 %v863
        %920 = vmatprep.subr.mxu0 0.0
        %921 = vmatpush1.msra.mxu0 %v864
        %922 = vmatprep.subr.mxu0 0.0
        %923 = vmatpush1.msra.mxu0 0.0
        %924 = vmatprep.subr.mxu0 0.0
        %925 = vmatpush1.msra.mxu0 0.0
        %926 = vmatprep.subr.mxu0 0.0
        %927 = vmatpush1.msra.mxu0 0.0
        %928 = vmatprep.subr.mxu0 0.0
        %929 = vmatpush1.msra.mxu0 0.0
        %930 = vmatprep.subr.mxu0 0.0
        %931 = vmatpush1.msra.mxu0 0.0
        %932 = vmatprep.subr.mxu0 0.0
        %933 = vmatpush1.msra.mxu0 0.0
        %934 = vmatprep.subr.mxu0 0.0
        %935 = vmatpush1.msra.mxu0 0.0
        %936 = vmatprep.subr.mxu0 0.0
        %937 = vmatpush1.msra.mxu0 0.0
        %938 = vmatprep.subr.mxu0 0.0
        %939 = vmatpush1.msra.mxu0 0.0
        %940 = vmatprep.subr.mxu0 0.0
        %941 = vmatpush1.msra.mxu0 0.0
        %942 = vmatprep.subr.mxu0 0.0
        %943 = vmatpush1.msra.mxu0 0.0
        %944 = vmatprep.subr.mxu0 0.0
        %945 = vmatpush1.msra.mxu0 0.0
        %946 = vmatprep.subr.mxu0 0.0
        %947 = vmatpush1.msra.mxu0 0.0
        %948 = vmatprep.subr.mxu0 0.0
        %949 = vmatpush1.msra.mxu0 0.0
        %950 = vmatprep.subr.mxu0 0.0
        %951 = vmatpush1.msra.mxu0 0.0
        %952 = vmatprep.subr.mxu0 0.0
        %953 = vmatpush1.msra.mxu0 0.0
        %954 = vmatprep.subr.mxu0 0.0
        %955 = vmatpush1.msra.mxu0 0.0
        %956 = vmatprep.subr.mxu0 0.0
        %957 = vmatpush1.msra.mxu0 0.0
        %958 = vmatprep.subr.mxu0 0.0
        %959 = vmatpush1.msra.mxu0 0.0
        %960 = vmatprep.subr.mxu0 0.0
        %961 = vmatpush1.msra.mxu0 0.0
        %962 = vmatprep.subr.mxu0 0.0
        %963 = vmatpush1.msra.mxu0 0.0
        %964 = vmatprep.subr.mxu0 0.0
        %965 = vmatpush1.msra.mxu0 0.0
        %966 = vmatprep.subr.mxu0 0.0
        %967 = vmatpush1.msra.mxu0 0.0
        %968 = vmatprep.subr.mxu0 0.0
        %969 = vmatpush1.msra.mxu0 0.0
        %970 = vmatprep.subr.mxu0 0.0
        %971 = vmatpush1.msra.mxu0 0.0
        %972 = vmatprep.subr.mxu0 0.0
        %973 = vmatpush1.msra.mxu0 0.0
        %974 = vmatprep.subr.mxu0 0.0
        %975 = vmatpush1.msra.mxu0 0.0
        %976 = vmatprep.subr.mxu0 0.0
        %977 = vmatpush1.msra.mxu0 0.0
        %978 = vmatprep.mubr.f32.mxu0 0.0
        %979 = vmatmul.mubr.f32.gmra.mrb[0].mxu0 %v867
        %v980 = vpop.f32.mrb[0].mxu0
        %v981 = vadd.f32 0.0, %v980
        %v982 = vpop.f32.mrb[0].mxu0
        %983 = vmatprep.mubr.f32.mxu0 0.0
        %984 = vmatmul.mubr.f32.gmra.mrb[0].mxu0 %v870
        %v985 = vpop.f32.mrb[0].mxu0
        %v986 = vadd.f32 0.0, %v985
        %v987 = vpop.f32.mrb[0].mxu0
        %988 = vmatprep.mubr.f32.mxu0 0.0
        %989 = vmatmul.mubr.f32.gmra.mrb[0].mxu0 %v873
        %v990 = vpop.f32.mrb[0].mxu0
        %v991 = vadd.f32 0.0, %v990
        %v992 = vpop.f32.mrb[0].mxu0
        %993 = vmatprep.mubr.f32.mxu0 0.0
        %994 = vmatmul.mubr.f32.gmra.mrb[0].mxu0 %v876
        %v995 = vpop.f32.mrb[0].mxu0
        %v996 = vadd.f32 0.0, %v995
        %v997 = vpop.f32.mrb[0].mxu0
        %998 = vmatprep.mubr.f32.mxu0 0.0
        %999 = vmatmul.mubr.f32.gmra.mrb[0].mxu0 %v879
        %v1000 = vpop.f32.mrb[0].mxu0
        %v1001 = vadd.f32 0.0, %v1000
        %v1002 = vpop.f32.mrb[0].mxu0
        %1003 = vmatprep.mubr.f32.mxu0 0.0
        %1004 = vmatmul.mubr.f32.gmra.mrb[0].mxu0 %v882
        %v1005 = vpop.f32.mrb[0].mxu0
        %v1006 = vadd.f32 0.0, %v1005
        %v1007 = vpop.f32.mrb[0].mxu0
        %1008 = vmatprep.mubr.f32.mxu0 0.0
        %1009 = vmatmul.mubr.f32.gmra.mrb[0].mxu0 %v885
        %v1010 = vpop.f32.mrb[0].mxu0
        %v1011 = vadd.f32 0.0, %v1010
        %v1012 = vpop.f32.mrb[0].mxu0
        %1013 = vmatprep.mubr.f32.mxu0 0.0
        %1014 = vmatmul.mubr.f32.gmra.mrb[0].mxu0 %v888
        %v1015 = vpop.f32.mrb[0].mxu0
        %v1016 = vadd.f32 0.0, %v1015
        %v1017 = vpop.f32.mrb[0].mxu0
        %1018 = vmatprep.mubr.f32.mxu0 0.0
        %1019 = vmatmul.mubr.f32.gmra.mrb[0].mxu0 %v891
        %v1020 = vpop.f32.mrb[0].mxu0
        %v1021 = vadd.f32 0.0, %v1020
        %v1022 = vpop.f32.mrb[0].mxu0
        %1023 = vmatprep.mubr.f32.mxu0 0.0
        %1024 = vmatmul.mubr.f32.gmra.mrb[0].mxu0 %v894
        %v1025 = vpop.f32.mrb[0].mxu0
        %v1026 = vadd.f32 0.0, %v1025
        %v1027 = vpop.f32.mrb[0].mxu0
        %1028 = vmatprep.mubr.f32.mxu0 0.0
        %1029 = vmatmul.mubr.f32.gmra.mrb[0].mxu0 %v897
        %v1030 = vpop.f32.mrb[0].mxu0
        %v1031 = vadd.f32 0.0, %v1030
        %v1032 = vpop.f32.mrb[0].mxu0
        %1033 = vmatprep.mubr.f32.mxu0 0.0
        %1034 = vmatmul.mubr.f32.gmra.mrb[0].mxu0 %v900
        %v1035 = vpop.f32.mrb[0].mxu0
        %v1036 = vadd.f32 0.0, %v1035
        %v1037 = vpop.f32.mrb[0].mxu0
        %1038 = vmatprep.mubr.f32.mxu0 0.0
        %1039 = vmatmul.mubr.f32.gmra.mrb[0].mxu0 %v903
        %v1040 = vpop.f32.mrb[0].mxu0
        %v1041 = vadd.f32 0.0, %v1040
        %v1042 = vpop.f32.mrb[0].mxu0
        %1043 = vmatprep.mubr.f32.mxu0 0.0
        %1044 = vmatmul.mubr.f32.gmra.mrb[0].mxu0 %v906
        %v1045 = vpop.f32.mrb[0].mxu0
        %v1046 = vadd.f32 0.0, %v1045
        %v1047 = vpop.f32.mrb[0].mxu0
        %1048 = vmatprep.mubr.f32.mxu0 0.0
        %1049 = vmatmul.mubr.f32.gmra.mrb[0].mxu0 %v909
        %v1050 = vpop.f32.mrb[0].mxu0
        %v1051 = vadd.f32 0.0, %v1050
        %v1052 = vpop.f32.mrb[0].mxu0
        %1053 = vmatprep.mubr.f32.mxu0 0.0
        %1054 = vmatmul.mubr.f32.gmra.mrb[0].mxu0 %v912
        %v1055 = vpop.f32.mrb[0].mxu0
        %v1056 = vadd.f32 0.0, %v1055
        %v1057 = vpop.f32.mrb[0].mxu0
        %1058 = vdwg.mxu0
        %v1059 = vmul.f32 %v557, 1.442695
        %v1060 = vpow.pop %v1059
        %v1061 = vmul.f32 %v562, 1.442695
        %v1062 = vpow.pop %v1061
        %v1063 = vmul.f32 %v567, 1.442695
        %v1064 = vpow.pop %v1063
        %v1065 = vmul.f32 %v572, 1.442695
        %v1066 = vpow.pop %v1065
        %v1067 = vmul.f32 %v577, 1.442695
        %v1068 = vpow.pop %v1067
        %v1069 = vmul.f32 %v582, 1.442695
        %v1070 = vpow.pop %v1069
        %v1071 = vmul.f32 %v587, 1.442695
        %v1072 = vpow.pop %v1071
        %v1073 = vmul.f32 %v592, 1.442695
        %v1074 = vpow.pop %v1073
        %v1075 = vmul.f32 %v597, 1.442695
        %v1076 = vpow.pop %v1075
        %v1077 = vmul.f32 %v602, 1.442695
        %v1078 = vpow.pop %v1077
        %v1079 = vmul.f32 %v607, 1.442695
        %v1080 = vpow.pop %v1079
        %v1081 = vmul.f32 %v612, 1.442695
        %v1082 = vpow.pop %v1081
        %v1083 = vmul.f32 %v617, 1.442695
        %v1084 = vpow.pop %v1083
        %v1085 = vmul.f32 %v622, 1.442695
        %v1086 = vpow.pop %v1085
        %v1087 = vmul.f32 %v627, 1.442695
        %v1088 = vpow.pop %v1087
        %v1089 = vmul.f32 %v632, 1.442695
        %v1090 = vpow.pop %v1089
        %v1091 = vmul.f32 %v767, 1.442695
        %v1092 = vpow.pop %v1091
        %v1093 = vmul.f32 %v772, 1.442695
        %v1094 = vpow.pop %v1093
        %v1095 = vmul.f32 %v777, 1.442695
        %v1096 = vpow.pop %v1095
        %v1097 = vmul.f32 %v782, 1.442695
        %v1098 = vpow.pop %v1097
        %v1099 = vmul.f32 %v787, 1.442695
        %v1100 = vpow.pop %v1099
        %v1101 = vmul.f32 %v792, 1.442695
        %v1102 = vpow.pop %v1101
        %v1103 = vmul.f32 %v797, 1.442695
        %v1104 = vpow.pop %v1103
        %v1105 = vmul.f32 %v802, 1.442695
        %v1106 = vpow.pop %v1105
        %v1107 = vmul.f32 %v807, 1.442695
        %v1108 = vpow.pop %v1107
        %v1109 = vmul.f32 %v812, 1.442695
        %v1110 = vpow.pop %v1109
        %v1111 = vmul.f32 %v817, 1.442695
        %v1112 = vpow.pop %v1111
        %v1113 = vmul.f32 %v822, 1.442695
        %v1114 = vpow.pop %v1113
        %v1115 = vmul.f32 %v827, 1.442695
        %v1116 = vpow.pop %v1115
        %v1117 = vmul.f32 %v832, 1.442695
        %v1118 = vpow.pop %v1117
        %v1119 = vmul.f32 %v837, 1.442695
        %v1120 = vpow.pop %v1119
        %v1121 = vmul.f32 %v842, 1.442695
        %v1122 = vpow.pop %v1121
        %v1123 = vadd.f32 %v1060, %v1092
        %v1124 = vadd.f32 %v1062, %v1094
        %v1125 = vadd.f32 %v1064, %v1096
        %v1126 = vadd.f32 %v1066, %v1098
        %v1127 = vadd.f32 %v1068, %v1100
        %v1128 = vadd.f32 %v1070, %v1102
        %v1129 = vadd.f32 %v1072, %v1104
        %v1130 = vadd.f32 %v1074, %v1106
        %v1131 = vadd.f32 %v1076, %v1108
        %v1132 = vadd.f32 %v1078, %v1110
        %v1133 = vadd.f32 %v1080, %v1112
        %v1134 = vadd.f32 %v1082, %v1114
        %v1135 = vadd.f32 %v1084, %v1116
        %v1136 = vadd.f32 %v1086, %v1118
        %v1137 = vadd.f32 %v1088, %v1120
        %v1138 = vadd.f32 %v1090, %v1122
        %v1139 = vmul.f32 %v981, %v1123
        %v1140 = vmul.f32 %v986, %v1124
        %v1141 = vmul.f32 %v991, %v1125
        %v1142 = vmul.f32 %v996, %v1126
        %v1143 = vmul.f32 %v1001, %v1127
        %v1144 = vmul.f32 %v1006, %v1128
        %v1145 = vmul.f32 %v1011, %v1129
        %v1146 = vmul.f32 %v1016, %v1130
        %v1147 = vmul.f32 %v1021, %v1131
        %v1148 = vmul.f32 %v1026, %v1132
        %v1149 = vmul.f32 %v1031, %v1133
        %v1150 = vmul.f32 %v1036, %v1134
        %v1151 = vmul.f32 %v1041, %v1135
        %v1152 = vmul.f32 %v1046, %v1136
        %v1153 = vmul.f32 %v1051, %v1137
        %v1154 = vmul.f32 %v1056, %v1138
        %1155 = vst [vmem:[%s377] sm:$0xff] %v1139
        %1156 = vst [vmem:[%s377 + $0x8] sm:$0xff] %v1140
        %1157 = vst [vmem:[%s377 + $0x10] sm:$0xff] %v1141
        %1158 = vst [vmem:[%s377 + $0x18] sm:$0xff] %v1142
        %1159 = vst [vmem:[%s377 + $0x20] sm:$0xff] %v1143
        %1160 = vst [vmem:[%s377 + $0x28] sm:$0xff] %v1144
        %1161 = vst [vmem:[%s377 + $0x30] sm:$0xff] %v1145
        %1162 = vst [vmem:[%s377 + $0x38] sm:$0xff] %v1146
        %1163 = vst [vmem:[%s377 + $0x40] sm:$0xff] %v1147
        %1164 = vst [vmem:[%s377 + $0x48] sm:$0xff] %v1148
        %1165 = vst [vmem:[%s377 + $0x50] sm:$0xff] %v1149
        %1166 = vst [vmem:[%s377 + $0x58] sm:$0xff] %v1150
        %1167 = vst [vmem:[%s377 + $0x60] sm:$0xff] %v1151
        %1168 = vst [vmem:[%s377 + $0x68] sm:$0xff] %v1152
        %1169 = vst [vmem:[%s377 + $0x70] sm:$0xff] %v1153
        %1170 = vst [vmem:[%s377 + $0x78] sm:$0xff] %v1154
        %s1171 = sand.u32 %s215, 1
        %s1172 = scalar_lea.sflag [#allocation3], %s1171
        %s1173 = sand.u32 %s215, 1
        %s1174 = smul.addr %s1173, 128
        %s1175 = scalar_lea.vmem [#allocation2], %s1174
        // Predicated region
        $region45: #{tpu_custom_call.1} parent=43 // pred_check
          %p1176 = pneg %p225
        $region46: #{tpu_custom_call.1} parent=43 // pred_check_branch
          %1178 = sbr.rel (%p1176) target = $region48
        $region47: #{tpu_custom_call.1} parent=43 // pred_region
          %s1179 = smul.u32 16, %s26
          %s1181 = ssub.s32 2048, 2048
          %1182 = vsyncadd %s1172, %s1181
          %s1183 = sadd.s32 %s27, %s1179
          %s1184 = smul.addr %s25, 16
          %s1185 = sadd.s32 %s1183, %s1184
          %s1186 = smul.addr %s1185, 128
          %s1187 = scalar_lea.hbm %s6, %s1186
          %s1188 = sshll.u32 %s1175, 4
          %s1189 = int_to_ptr.vmem [resolvable:$true] %s1188
          %1194 = dma.vmem_to_hbm [thread:$0]  %s1189, 2048, %s1187, %s1172, 128, 128, 8
        $region48: #{tpu_custom_call.1} parent=43 // pred_fallthru
          _
      $region44: #{tpu_custom_call.1} parent=5 // pred_fallthru
        _
      %p1195 = scmp.le.s32.totalorder 2, %s15
      // Predicated region
      $region49: #{tpu_custom_call.1} parent=5 // pred_check
        %p1196 = pneg %p1195
      $region50: #{tpu_custom_call.1} parent=5 // pred_check_branch
        %1198 = sbr.rel (%p1196) target = $region52
      $region51: #{tpu_custom_call.1} parent=5 // pred_region
        %s1199 = ssub.s32 %s15, 2
        // Predicated region
        $region53: #{tpu_custom_call.1} parent=51 // pred_check
          %p1200 = pneg %p231
        $region54: #{tpu_custom_call.1} parent=51 // pred_check_branch
          %1202 = sbr.rel (%p1200) target = $region56
        $region55: #{tpu_custom_call.1} parent=51 // pred_region
          %s1203 = sand.u32 %s216, 1
          %s1204 = scalar_lea.sflag [#allocation3], %s1203
          %s1205 = sand.u32 %s216, 1
          %s1206 = smul.addr %s1205, 128
          %s1207 = scalar_lea.vmem [#allocation2], %s1206
          %1208 = dma.done %s1204, 2048
        $region56: #{tpu_custom_call.1} parent=51 // pred_fallthru
          _
      $region52: #{tpu_custom_call.1} parent=5 // pred_fallthru
        _
    $region6: #{tpu_custom_call.1} parent=1 // loop_footer
      %s19 = sadd.s32 1, %s15
    $region7: #{tpu_custom_call.1} parent=1 // loop_footer_branch
      %14 = sbr.rel target = $region3
    $region8: #{tpu_custom_call.1} parent=1 // loop_exit
      _
    %1209 = vsyncpa [#allocation3], 1
    %s1210 = scalar_lea.sflag [#allocation3], 1
    %1211 = vsyncpa %s1210, 1

</llo_original>
